<compile_context>
chip_gen: v7x
topology: tpu7x:2x2x1
jax: 0.10.0
libtpu: 0.0.40
codegen_flags: <defaults>
</compile_context>

<pallas_src>
import math

import jax
import jax.numpy as jnp
from jax.experimental import pallas as pl
from jax.experimental.pallas import tpu as pltpu


# ----------------------------- Pallas kernel --------------------------------
def _glu_kernel(x_ref, w_ref, o_ref):
    # x_ref:  (TR, FP)   packed row tile (FP = PACK*F, lane-dense)
    # w_ref:  (FP, FP)   block-diagonal W^T (PACK copies of the (F,F) W^T)
    # o_ref:  (TR, FP)   packed output tile
    x = x_ref[...]
    gate = jnp.dot(x, w_ref[...], preferred_element_type=jnp.float32)
    o_ref[...] = (x.astype(jnp.float32) * jax.nn.sigmoid(gate)).astype(o_ref.dtype)


# ------------------------------- wrapper -------------------------------------
def _cdiv(a, b):
    return (a + b - 1) // b


def _round_up(a, b):
    return _cdiv(a, b) * b


@jax.jit
def glu_forward(x, w):
    """x: (B, T, F) float32; w: (F, F) effective Linear weight (out, in)."""
    B, T, F = x.shape
    M = B * T
    x2 = x.reshape(M, F)
    wt = jnp.transpose(w)  # (in, out) so that x2 @ wt == x2 @ w.T (PyTorch Linear)

    # Lane-density packing: pack PACK consecutive rows so the trailing dim of
    # the kernel's I/O slab is a multiple of 128 (unmasked vst).  Fall back to
    # no packing if F is awkward (keeps the block-diag weight small).
    pack = 128 // math.gcd(F, 128)
    if pack > 8:
        pack = 1
    FP = pack * F

    if pack > 1:
        # Block-diagonal weight: (FP, FP) with `pack` copies of wt on the diag.
        wbd = jnp.kron(jnp.eye(pack, dtype=wt.dtype), wt)
    else:
        wbd = wt

    # Row tiling in packed rows, VMEM-budgeted (1024 * FP=128 * 4 B = 512 KiB
    # per buffer; with double-buffered in/out + weight this is well under the
    # scoped VMEM limit on v5e/v6e/v7x), and a multiple of 8 sublanes.
    mp_raw = _cdiv(M, pack)
    tile_rows = min(1024, _round_up(mp_raw, 8))
    mp = _round_up(mp_raw, tile_rows)

    pad_rows = mp * pack - M
    if pad_rows:
        x2 = jnp.pad(x2, ((0, pad_rows), (0, 0)))
    xp = x2.reshape(mp, FP)

    grid = (mp // tile_rows,)

    cost = pl.CostEstimate(
        flops=2 * mp * FP * FP,
        transcendentals=mp * FP,
        bytes_accessed=2 * mp * FP * 4 + FP * FP * 4,
    )

    out = pl.pallas_call(
        _glu_kernel,
        out_shape=jax.ShapeDtypeStruct((mp, FP), x.dtype),
        grid_spec=pltpu.PrefetchScalarGridSpec(
            num_scalar_prefetch=0,
            grid=grid,
            in_specs=[
                pl.BlockSpec((tile_rows, FP), lambda i: (i, 0)),  # packed x tile
                # Weight is tiny (128x128 f32 = 64 KiB) so default
                # double-buffering of this constant-index block is negligible.
                pl.BlockSpec((FP, FP), lambda i: (0, 0)),
            ],
            out_specs=pl.BlockSpec((tile_rows, FP), lambda i: (i, 0)),
        ),
        compiler_params=pltpu.CompilerParams(
            dimension_semantics=("parallel",),
            vmem_limit_bytes=32 * 1024 * 1024,
        ),
        cost_estimate=cost,
    )(xp, wbd)

    out = out.reshape(mp * pack, F)[:M]
    return out.reshape(B, T, F)


# --------------------------- parameter construction --------------------------
def make_glu_weight(feat_size, key):
    """Deterministic synthetic weight_norm(Linear) weight.

    weight_norm parametrizes  W = g * v / ||v||  (norm over input dim, per
    output row).  We build v from an orthogonal-ish init (QR of a gaussian,
    mirroring nn.init.orthogonal_) and g as a perturbed per-row norm, then
    return the effective dense weight W of shape (out_features, in_features).
    """
    kv, kg = jax.random.split(key)
    a = jax.random.normal(kv, (feat_size, feat_size), dtype=jnp.float32)
    q, r = jnp.linalg.qr(a)
    d = jnp.sign(jnp.diag(r))  # sign fix like torch.nn.init.orthogonal_
    v = q * d[None, :]
    row_norm = jnp.sqrt(jnp.sum(v * v, axis=1, keepdims=True))
    g = row_norm * (1.0 + 0.1 * jax.random.normal(kg, (feat_size, 1)))
    w = g * v / row_norm
    return w.astype(jnp.float32)


# ----------------------------------- main ------------------------------------
if __name__ == "__main__":
    key = jax.random.PRNGKey(0)
    k_x, k_w = jax.random.split(key)

    B, T, F = 2, 8, 32          # batch, seq, feat_size
    x = jax.random.normal(k_x, (B, T, F), dtype=jnp.float32)
    w = make_glu_weight(F, k_w)

    out = glu_forward(x, w)
    out = jax.block_until_ready(out)

    # pure-JAX reference
    ref = x * jax.nn.sigmoid(jnp.einsum("btf,of->bto", x, w))
    assert out.shape == x.shape
    assert jnp.allclose(out, ref, atol=1e-5, rtol=1e-5), "mismatch vs reference"

    print("KERNEL_OK")
</pallas_src>

<mosaic_0001>
module attributes {stable_mosaic.version = 11 : i64} {
  func.func @_glu_kernel(%arg0: i32, %arg1: memref<8x128xf32, #tpu.memory_space<vmem>>, %arg2: memref<128x128xf32, #tpu.memory_space<vmem>>, %arg3: memref<8x128xf32, #tpu.memory_space<vmem>>) attributes {dimension_semantics = [#tpu.dimension_semantics<parallel>], iteration_bounds = array<i64: 1>, scalar_prefetch = 0 : i64, scratch_operands = 0 : i64, tpu.core_type = #tpu.core_type<tc>, window_params = [{transform_indices = @transform_0, window_bounds = array<i64: 8, 128>}, {pipeline_mode = #tpu.pipeline_mode<synchronous>, transform_indices = @transform_1, window_bounds = array<i64: 128, 128>}, {transform_indices = @transform_2, window_bounds = array<i64: 8, 128>}]} {
    %c0 = arith.constant 0 : index
    %c0_0 = arith.constant 0 : index
    %0 = vector.load %arg1[%c0, %c0_0] : memref<8x128xf32, #tpu.memory_space<vmem>>, vector<8x128xf32>
    %c0_1 = arith.constant 0 : index
    %c0_2 = arith.constant 0 : index
    %1 = vector.load %arg2[%c0_1, %c0_2] : memref<128x128xf32, #tpu.memory_space<vmem>>, vector<128x128xf32>
    %cst = arith.constant dense<0.000000e+00> : vector<8x128xf32>
    %2 = tpu.matmul %0, %1, %cst {dimension_numbers = #tpu.dot_dimension_numbers<[1], [0], [0], [1], [0, 0, 1, 1], [], []>} : vector<8x128xf32>, vector<128x128xf32>, vector<8x128xf32> -> vector<8x128xf32>
    %3 = arith.negf %2 : vector<8x128xf32>
    %4 = math.exp %3 : vector<8x128xf32>
    %cst_3 = arith.constant 1.000000e+00 : f32
    %5 = vector.broadcast %cst_3 : f32 to vector<8x128xf32>
    %6 = arith.addf %5, %4 : vector<8x128xf32>
    %7 = arith.divf %5, %6 : vector<8x128xf32>
    %8 = arith.mulf %0, %7 : vector<8x128xf32>
    %c0_4 = arith.constant 0 : index
    %c0_5 = arith.constant 0 : index
    %9 = vector.load %arg3[%c0_4, %c0_5] : memref<8x128xf32, #tpu.memory_space<vmem>>, vector<8x128xf32>
    tpu.vector_store %arg3[%c0_4, %c0_5], %8 {strides = array<i32>} : memref<8x128xf32, #tpu.memory_space<vmem>>, vector<8x128xf32>,
    return
  }
  func.func @transform_0(%arg0: i32) -> (i32, i32) {
    %c0_i32 = arith.constant 0 : i32
    %c0_i32_0 = arith.constant 0 : i32
    return %arg0, %c0_i32 : i32, i32
  }
  func.func @transform_1(%arg0: i32) -> (i32, i32) {
    %c0_i32 = arith.constant 0 : i32
    %c0_i32_0 = arith.constant 0 : i32
    %c0_i32_1 = arith.constant 0 : i32
    return %c0_i32, %c0_i32_0 : i32, i32
  }
  func.func @transform_2(%arg0: i32) -> (i32, i32) {
    %c0_i32 = arith.constant 0 : i32
    %c0_i32_0 = arith.constant 0 : i32
    return %arg0, %c0_i32 : i32, i32
  }
}

</mosaic_0001>

<llo_original>
// kernel: glu_forward.1
$region0: #{glu_forward.1}
  #allocation0 [shape = 'u32[]', space=smem, size = 0x4, offset = 0x4, fixed_abs, tag = 'smem constant byte address 0x4 - core index']
  #allocation1 [shape = 'u32[144,128]{1,0:T(1,128)}', space=vmem, size = 0x12000, scoped, tag = 'internal scratch']
  %s0 = inlined_call_operand.vmem [shape: f32[8,128], index: 0, kind: input, shape index: {}]
  %s1 = inlined_call_operand.vmem [shape: f32[128,128], index: 1, kind: input, shape index: {}]
  %s2 = inlined_call_operand.vmem [shape: f32[8,128], index: 2, kind: output, shape index: {}]
  %s3 = sld [smem:[#allocation0]]
  $region18: #{glu_forward.1} parent=0
    _
  %s5 = ssub.s32 1, %s3
  %s6 = scalar_select 0, %s5, %s3
  // Predicated region
  $region2: #{glu_forward.1} parent=0 // pred_check
    _
  $region3: #{glu_forward.1} parent=0 // pred_check_branch
    %8 = sbr.rel (0) target = $region5
  $region4: #{glu_forward.1} parent=0 // pred_region
    _
  $region5: #{glu_forward.1} parent=0 // pred_fallthru
    _
  // Predicated region
  $region6: #{glu_forward.1} parent=0 // pred_check
    _
  $region7: #{glu_forward.1} parent=0 // pred_check_branch
    %10 = sbr.rel (0) target = $region9
  $region8: #{glu_forward.1} parent=0 // pred_region
    _
  $region9: #{glu_forward.1} parent=0 // pred_fallthru
    _
  %v11 = vld [vmem:[%s0] sm:$0xff]
  %v12 = vld [vmem:[%s1] sm:$0xff]
  %v13 = vld [vmem:[%s1 + $0x8] sm:$0xff]
  %v14 = vld [vmem:[%s1 + $0x10] sm:$0xff]
  %v15 = vld [vmem:[%s1 + $0x18] sm:$0xff]
  %v16 = vld [vmem:[%s1 + $0x20] sm:$0xff]
  %v17 = vld [vmem:[%s1 + $0x28] sm:$0xff]
  %v18 = vld [vmem:[%s1 + $0x30] sm:$0xff]
  %v19 = vld [vmem:[%s1 + $0x38] sm:$0xff]
  %v20 = vld [vmem:[%s1 + $0x40] sm:$0xff]
  %v21 = vld [vmem:[%s1 + $0x48] sm:$0xff]
  %v22 = vld [vmem:[%s1 + $0x50] sm:$0xff]
  %v23 = vld [vmem:[%s1 + $0x58] sm:$0xff]
  %v24 = vld [vmem:[%s1 + $0x60] sm:$0xff]
  %v25 = vld [vmem:[%s1 + $0x68] sm:$0xff]
  %v26 = vld [vmem:[%s1 + $0x70] sm:$0xff]
  %v27 = vld [vmem:[%s1 + $0x78] sm:$0xff]
  %28 = vmatprep.subr.mxu0 0.0
  %29 = vmatpush1.msra.mxu0 %v12
  %30 = vmatprep.subr.mxu0 0.0
  %31 = vmatpush1.msra.mxu0 %v13
  %32 = vmatprep.subr.mxu0 0.0
  %33 = vmatpush1.msra.mxu0 %v14
  %34 = vmatprep.subr.mxu0 0.0
  %35 = vmatpush1.msra.mxu0 %v15
  %36 = vmatprep.subr.mxu0 0.0
  %37 = vmatpush1.msra.mxu0 %v16
  %38 = vmatprep.subr.mxu0 0.0
  %39 = vmatpush1.msra.mxu0 %v17
  %40 = vmatprep.subr.mxu0 0.0
  %41 = vmatpush1.msra.mxu0 %v18
  %42 = vmatprep.subr.mxu0 0.0
  %43 = vmatpush1.msra.mxu0 %v19
  %44 = vmatprep.subr.mxu0 0.0
  %45 = vmatpush1.msra.mxu0 %v20
  %46 = vmatprep.subr.mxu0 0.0
  %47 = vmatpush1.msra.mxu0 %v21
  %48 = vmatprep.subr.mxu0 0.0
  %49 = vmatpush1.msra.mxu0 %v22
  %50 = vmatprep.subr.mxu0 0.0
  %51 = vmatpush1.msra.mxu0 %v23
  %52 = vmatprep.subr.mxu0 0.0
  %53 = vmatpush1.msra.mxu0 %v24
  %54 = vmatprep.subr.mxu0 0.0
  %55 = vmatpush1.msra.mxu0 %v25
  %56 = vmatprep.subr.mxu0 0.0
  %57 = vmatpush1.msra.mxu0 %v26
  %58 = vmatprep.subr.mxu0 0.0
  %59 = vmatpush1.msra.mxu0 %v27
  %60 = vmatprep.subr.mxu0 0.0
  %61 = vmatpush1.msra.mxu0 0.0
  %62 = vmatprep.subr.mxu0 0.0
  %63 = vmatpush1.msra.mxu0 0.0
  %64 = vmatprep.subr.mxu0 0.0
  %65 = vmatpush1.msra.mxu0 0.0
  %66 = vmatprep.subr.mxu0 0.0
  %67 = vmatpush1.msra.mxu0 0.0
  %68 = vmatprep.subr.mxu0 0.0
  %69 = vmatpush1.msra.mxu0 0.0
  %70 = vmatprep.subr.mxu0 0.0
  %71 = vmatpush1.msra.mxu0 0.0
  %72 = vmatprep.subr.mxu0 0.0
  %73 = vmatpush1.msra.mxu0 0.0
  %74 = vmatprep.subr.mxu0 0.0
  %75 = vmatpush1.msra.mxu0 0.0
  %76 = vmatprep.subr.mxu0 0.0
  %77 = vmatpush1.msra.mxu0 0.0
  %78 = vmatprep.subr.mxu0 0.0
  %79 = vmatpush1.msra.mxu0 0.0
  %80 = vmatprep.subr.mxu0 0.0
  %81 = vmatpush1.msra.mxu0 0.0
  %82 = vmatprep.subr.mxu0 0.0
  %83 = vmatpush1.msra.mxu0 0.0
  %84 = vmatprep.subr.mxu0 0.0
  %85 = vmatpush1.msra.mxu0 0.0
  %86 = vmatprep.subr.mxu0 0.0
  %87 = vmatpush1.msra.mxu0 0.0
  %88 = vmatprep.subr.mxu0 0.0
  %89 = vmatpush1.msra.mxu0 0.0
  %90 = vmatprep.subr.mxu0 0.0
  %91 = vmatpush1.msra.mxu0 0.0
  %92 = vmatprep.mubr.f32.mxu0 0.0
  %93 = vmatmul.mubr.f32.gmra.mrb[0].mxu0 %v11
  %v94 = vpop.f32.mrb[0].mxu0
  %v95 = vadd.f32 0.0, %v94
  %v96 = vpop.f32.mrb[0].mxu0
  %97 = vdwg.mxu0
  %v98 = vxor.u32 %v95, 2147483648
  %v99 = vmul.f32 %v98, 1.442695
  %v100 = vpow.pop %v99
  %v101 = vadd.f32 %v100, 1.0
  %v102 = vrcp.pop %v101
  %v103 = vmul.f32 1.0, %v102
  %v104 = vmul.f32 %v11, %v103
  %105 = vst [vmem:[%s2] sm:$0xff] %v104
  // Predicated region
  $region10: #{glu_forward.1} parent=0 // pred_check
    _
  $region11: #{glu_forward.1} parent=0 // pred_check_branch
    %107 = sbr.rel (0) target = $region13
  $region12: #{glu_forward.1} parent=0 // pred_region
    _
  $region13: #{glu_forward.1} parent=0 // pred_fallthru
    _
  // Predicated region
  $region14: #{glu_forward.1} parent=0 // pred_check
    _
  $region15: #{glu_forward.1} parent=0 // pred_check_branch
    %109 = sbr.rel (0) target = $region17
  $region16: #{glu_forward.1} parent=0 // pred_region
    _
  $region17: #{glu_forward.1} parent=0 // pred_fallthru
    _

</llo_original>
